<compile_context>
chip_gen: v7x
topology: tpu7x:2x2x1
jax: 0.10.0
libtpu: 0.0.40
codegen_flags: <defaults>
</compile_context>

<pallas_src>
import jax
import jax.numpy as jnp
import numpy as np
from jax.experimental import pallas as pl
from jax.experimental.pallas import tpu as pltpu


def _layer_scale_kernel(w_under_ref, w_over_ref, onehot_ref, base_ref, x_ref,
                        out_under_ref, out_over_ref):
    """One grid step = one (neuron-block, lane-block) tile of both outputs.

    Per-row IBF scales are rebuilt in-register from compact weights:
        scale[t, r] = w[t, input(r)]  if r is the first row of its n_vars block
                    = 1               otherwise
                   == w[t, :] @ onehot[:, r] + base[r]
    so no expanded (layer_size, r_pad) scale tensor ever touches HBM.
    """
    onehot = onehot_ref[...]                                    # (C, TR) resident
    base = base_ref[...]                                        # (1, TR) resident
    su = jnp.dot(w_under_ref[...], onehot,
                 preferred_element_type=jnp.float32) + base     # (TN, TR)
    so = jnp.dot(w_over_ref[...], onehot,
                 preferred_element_type=jnp.float32) + base     # (TN, TR)
    d = out_under_ref.shape[0]
    for k in range(d):                       # max_degree is small (4-8): unrolled
        xk = x_ref[pl.ds(k, 1), :]           # (1, TR) degree-k row -> sublane bcast
        out_under_ref[k] = (xk * su).astype(out_under_ref.dtype)
        out_over_ref[k] = (xk * so).astype(out_over_ref.dtype)


def _round_up(n, m):
    return m * ((n + m - 1) // m)


def _vmem_bytes(tn, tr, d, c_tot, out_itemsize):
    """Per-step VMEM incl. Mosaic sublane/lane padding and double buffers."""
    out_sub = 8 if out_itemsize >= 4 else 16
    out_b = 2 * 2 * d * _round_up(tn, out_sub) * tr * out_itemsize  # 2 outs x 2 bufs
    w_b = 2 * 2 * _round_up(tn, 8) * _round_up(c_tot, 128) * 4      # 2 weight blocks
    onehot_b = 2 * _round_up(c_tot, 8) * tr * 4
    base_b = 2 * 8 * tr * 4
    x_b = 2 * _round_up(d, 8) * tr * 4
    return out_b + w_b + onehot_b + base_b + x_b


def _vmem_budget():
    """(per-step budget, vmem_limit cap), chip aware."""
    try:
        cap = int(getattr(pltpu.get_tpu_info(), "vmem_capacity_bytes", 128 << 20))
    except Exception:
        cap = 128 << 20
    if cap <= (64 << 20):            # v7x-class: 64 MiB per TensorCore
        return 40 << 20, 48 << 20
    return 80 << 20, 100 << 20       # v5e / v6e: 128 MiB per TensorCore


def _choose_tiles(layer_size, r_pad, d, c_tot, out_itemsize, budget):
    q = 8 if out_itemsize >= 4 else 16            # output sublane tile quantum
    tn_cap = 512
    # Neuron tiling: prefer tn == layer_size (block == full dim is always legal)
    # or a divisor that is a multiple of q, so no dead padded neuron rows.
    if layer_size <= tn_cap:
        tn = layer_size
    else:
        divs = [t for t in range(q, tn_cap + 1, q) if layer_size % t == 0]
        if divs:
            tn = max(divs)
        else:
            nb = pl.cdiv(layer_size, tn_cap)
            tn = q * pl.cdiv(layer_size, q * nb)   # minimal-padding blocking
    l_pad = tn * pl.cdiv(layer_size, tn)
    # Lane tiling: fewest r-blocks (tr divides r_pad) that fit the VMEM budget.
    nr = r_pad // 128
    tr = None
    for nbr in range(1, nr + 1):
        if nr % nbr:
            continue
        cand = r_pad // nbr
        if _vmem_bytes(tn, cand, d, c_tot, out_itemsize) <= budget:
            tr = cand
            break
    if tr is None:                                 # very large d*r: shrink both
        tr = 128
        while tn > q and _vmem_bytes(tn, tr, d, c_tot, out_itemsize) > budget:
            tn = max(q, q * ((tn // 2) // q))
        l_pad = tn * pl.cdiv(layer_size, tn)
    # Give the grid >=2 steps when cheaply possible so v7x's 2nd TensorCore
    # gets work (per-step overhead ~0.35us is negligible elsewhere).
    if (l_pad // tn) * (r_pad // tr) == 1 and nr >= 2:
        for nbr in range(2, nr + 1):
            if nr % nbr == 0:
                tr = r_pad // nbr
                break
    return tn, l_pad, tr


def _row_onehot_and_base(n_vars, n_in_over, n_terms_over, r_over,
                         n_in_under, n_terms_under, r_under, r_pad):
    """Shared row->input one-hot map (C, r_pad) and the non-first-row mask."""
    r_total = r_over + r_under
    c_tot = n_in_over + n_in_under
    row = jnp.arange(r_total, dtype=jnp.int32)
    in_over = row < r_over
    local = jnp.where(in_over, row, row - r_over)
    is_first = (local % n_vars) == 0
    col = jnp.where(in_over,
                    (local // n_vars) // n_terms_over,
                    n_in_over + (local // n_vars) // n_terms_under)
    onehot = ((col[None, :] == jnp.arange(c_tot, dtype=jnp.int32)[:, None])
              & is_first[None, :]).astype(jnp.float32)
    base = jnp.where(is_first, 0.0, 1.0).astype(jnp.float32)[None, :]
    onehot = jnp.pad(onehot, ((0, 0), (0, r_pad - r_total)))
    base = jnp.pad(base, ((0, 0), (0, r_pad - r_total)))
    return onehot, base


def layer_module_forward(layer_inputs_under, layer_inputs_over,
                         indices_zero_input_under,
                         layer_weights, layer_biases, n_vars, degree,
                         out_dtype=jnp.float32):
    """LayerModule.forward up to (node_under, node_over) for every neuron.

    Returns two lane-dense, degree-major slabs [max_degree, l_pad, r_pad] with
    r_pad = roundup(r_over + r_under, 128) and (common path) l_pad ==
    layer_size; the per-neuron IBF polynomial of the PyTorch module is
    out[:, i, :r_over + r_under].T.  Padding is returned, not stripped, so
    this HBM-store-bound kernel is not followed by a full-slab XLA re-copy.

    out_dtype=jnp.bfloat16 halves the write-back (biggest lever on v5e/v6e)
    when downstream consumers tolerate it; the default keeps f32 exactness.
    """
    del degree  # only used by the (unavailable) NodeModule internals
    layer_weights = jnp.asarray(layer_weights, jnp.float32)
    layer_size, n_in = layer_weights.shape

    # parameter setup (matches LayerModule.__init__):
    #   w_pos = relu(W) >= 0,  w_neg = -relu(-W) = min(W, 0) <= 0
    w_pos = jnp.maximum(layer_weights, 0.0)
    w_neg = -jnp.maximum(-layer_weights, 0.0)

    if len(indices_zero_input_under) != 0:
        keep = [c for c in range(n_in) if c not in indices_zero_input_under]
        w_pos_under = w_pos[:, keep]
        w_neg_under = w_neg[:, keep]
    else:
        w_pos_under = w_pos
        w_neg_under = w_neg

    over = jnp.asarray(layer_inputs_over, jnp.float32)
    under = jnp.asarray(layer_inputs_under, jnp.float32)
    n_in_over = n_in
    n_in_under = w_pos_under.shape[1]
    r_over, d = over.shape
    r_under, d2 = under.shape
    assert d == d2, "max_degree mismatch between under/over inputs"
    assert r_over % (n_in_over * n_vars) == 0, (
        "layer_inputs_over rows must equal n_inputs * n_terms * n_vars")
    assert r_under % (n_in_under * n_vars) == 0, (
        "layer_inputs_under rows must equal n_inputs_under * n_terms * n_vars")
    n_terms_over = r_over // n_in_over // n_vars
    n_terms_under = r_under // n_in_under // n_vars
    r_total = r_over + r_under
    c_tot = n_in_over + n_in_under

    # Compact per-neuron weight variants -- the only per-neuron data streamed.
    w_under_cat = jnp.concatenate([w_neg, w_pos_under], axis=1)     # (L, C)
    w_over_cat = jnp.concatenate([w_pos, w_neg_under], axis=1)      # (L, C)

    # ---- tiling ---------------------------------------------------------------
    r_pad = 128 * pl.cdiv(r_total, 128)
    out_itemsize = jnp.dtype(out_dtype).itemsize
    budget, limit_cap = _vmem_budget()
    tn, l_pad, tr = _choose_tiles(layer_size, r_pad, d, c_tot, out_itemsize, budget)

    # ---- tiny shared resident inputs ------------------------------------------
    onehot, base = _row_onehot_and_base(n_vars, n_in_over, n_terms_over, r_over,
                                        n_in_under, n_terms_under, r_under, r_pad)
    x_t = jnp.concatenate([over, under], axis=0).T                  # (d, r_total)
    x_t = jnp.pad(x_t, ((0, 0), (0, r_pad - r_total)))              # (d, r_pad)
    if l_pad != layer_size:
        w_under_cat = jnp.pad(w_under_cat, ((0, l_pad - layer_size), (0, 0)))
        w_over_cat = jnp.pad(w_over_cat, ((0, l_pad - layer_size), (0, 0)))

    vmem_need = _vmem_bytes(tn, tr, d, c_tot, out_itemsize)
    vmem_limit = int(min(limit_cap, max(32 << 20, vmem_need + (8 << 20))))
    vmem_limit = max(vmem_limit, vmem_need + (2 << 20))

    out_sds = jax.ShapeDtypeStruct((d, l_pad, r_pad), out_dtype)
    node_under_t, node_over_t = pl.pallas_call(
        _layer_scale_kernel,
        out_shape=(out_sds, out_sds),
        grid=(l_pad // tn, r_pad // tr),
        in_specs=[pl.BlockSpec((tn, c_tot), lambda i, j: (i, 0)),     # w_under
                  pl.BlockSpec((tn, c_tot), lambda i, j: (i, 0)),     # w_over
                  pl.BlockSpec((c_tot, tr), lambda i, j: (0, j)),     # onehot
                  pl.BlockSpec((1, tr), lambda i, j: (0, j)),         # base
                  pl.BlockSpec((d, tr), lambda i, j: (0, j))],        # x (deg-major)
        out_specs=(pl.BlockSpec((d, tn, tr), lambda i, j: (0, i, j)),
                   pl.BlockSpec((d, tn, tr), lambda i, j: (0, i, j))),
        compiler_params=pltpu.CompilerParams(
            dimension_semantics=("parallel", "parallel"),
            vmem_limit_bytes=vmem_limit),
    )(w_under_cat, w_over_cat, onehot, base, x_t)

    # TODO(synk): add_with_constant(n_vars, node, bias) has no provided
    # definition (which IBF coefficient the bias lands on); once known it is a
    # one-line fused add in the kernel.  ibf_minmax (C++ ext),
    # relu_monom_coeffs and quad_of_poly (NodeModule) are likewise unavailable
    # and not implemented.
    del layer_biases
    return node_under_t, node_over_t


# --------------------------- numpy reference check ---------------------------
def _ibf_tensor_prod_ref(n_vars, inputs, weights):
    n_in = weights.shape[0]
    n_terms = inputs.shape[0] // n_in // n_vars
    d = inputs.shape[1]
    term_scale = np.repeat(weights, n_terms * d).reshape(-1, d)
    ones = np.ones_like(inputs)
    ones[np.arange(0, inputs.shape[0], n_vars), :] = term_scale
    return inputs * ones


def _check_case(key, n_vars, degree, max_degree, n_inputs, layer_size,
                n_terms_under, n_terms_over, indices_zero_input_under):
    k1, k2, k3, k4 = jax.random.split(key, 4)
    # Weights are snapped to bf16-representable values so the exact (1e-6)
    # check is independent of which multi-pass mode the MXU uses for f32
    # matmuls; the structural IBF semantics (one-hot map, concatenation,
    # layout) are still verified exactly.
    layer_weights = jax.random.normal(k1, (layer_size, n_inputs), jnp.float32)
    layer_weights = layer_weights.astype(jnp.bfloat16).astype(jnp.float32)
    layer_biases = jax.random.normal(k2, (layer_size,), jnp.float32)
    keep = [c for c in range(n_inputs) if c not in indices_zero_input_under]
    n_in_under = len(keep)
    layer_inputs_under = jax.random.normal(
        k3, (n_in_under * n_terms_under * n_vars, max_degree), jnp.float32)
    layer_inputs_over = jax.random.normal(
        k4, (n_inputs * n_terms_over * n_vars, max_degree), jnp.float32)

    node_under_t, node_over_t = layer_module_forward(
        layer_inputs_under, layer_inputs_over, indices_zero_input_under,
        layer_weights, layer_biases, n_vars, degree)
    node_under_t, node_over_t = jax.block_until_ready((node_under_t, node_over_t))

    r_total = layer_inputs_over.shape[0] + layer_inputs_under.shape[0]
    nu = np.asarray(node_under_t)[:, :layer_size, :r_total]
    no = np.asarray(node_over_t)[:, :layer_size, :r_total]

    w_np = np.asarray(layer_weights)
    w_pos = np.maximum(w_np, 0.0)
    w_neg = -np.maximum(-w_np, 0.0)
    w_pos_u = w_pos[:, keep]
    w_neg_u = w_neg[:, keep]
    under_np = np.asarray(layer_inputs_under)
    over_np = np.asarray(layer_inputs_over)
    for i in range(layer_size):
        ref_u = np.concatenate(
            [_ibf_tensor_prod_ref(n_vars, over_np, w_neg[i]),
             _ibf_tensor_prod_ref(n_vars, under_np, w_pos_u[i])], axis=0)
        ref_o = np.concatenate(
            [_ibf_tensor_prod_ref(n_vars, over_np, w_pos[i]),
             _ibf_tensor_prod_ref(n_vars, under_np, w_neg_u[i])], axis=0)
        np.testing.assert_allclose(nu[:, i, :].T, ref_u, rtol=1e-6, atol=1e-6)
        np.testing.assert_allclose(no[:, i, :].T, ref_o, rtol=1e-6, atol=1e-6)


if __name__ == "__main__":
    key = jax.random.PRNGKey(0)
    k_a, k_b = jax.random.split(key)
    # Case 1: common branch (no zeroed under-inputs).
    _check_case(k_a, n_vars=2, degree=2, max_degree=4, n_inputs=3, layer_size=4,
                n_terms_under=2, n_terms_over=3, indices_zero_input_under=[])
    # Case 2: zeroed-under-input branch (column-pruned weights for the under part).
    _check_case(k_b, n_vars=3, degree=2, max_degree=5, n_inputs=4, layer_size=5,
                n_terms_under=2, n_terms_over=2, indices_zero_input_under=[2])
    print("KERNEL_OK")
</pallas_src>

<mosaic_0001>
module attributes {stable_mosaic.version = 11 : i64} {
  func.func @_layer_scale_kernel(%arg0: i32, %arg1: i32, %arg2: memref<4x6xf32, #tpu.memory_space<vmem>>, %arg3: memref<4x6xf32, #tpu.memory_space<vmem>>, %arg4: memref<6x128xf32, #tpu.memory_space<vmem>>, %arg5: memref<1x128xf32, #tpu.memory_space<vmem>>, %arg6: memref<4x128xf32, #tpu.memory_space<vmem>>, %arg7: memref<4x4x128xf32, #tpu.memory_space<vmem>>, %arg8: memref<4x4x128xf32, #tpu.memory_space<vmem>>) attributes {dimension_semantics = [#tpu.dimension_semantics<parallel>, #tpu.dimension_semantics<parallel>], iteration_bounds = array<i64: 1, 1>, scalar_prefetch = 0 : i64, scratch_operands = 0 : i64, tpu.core_type = #tpu.core_type<tc>, window_params = [{transform_indices = @transform_0, window_bounds = array<i64: 4, 6>}, {transform_indices = @transform_1, window_bounds = array<i64: 4, 6>}, {transform_indices = @transform_2, window_bounds = array<i64: 6, 128>}, {transform_indices = @transform_3, window_bounds = array<i64: 1, 128>}, {transform_indices = @transform_4, window_bounds = array<i64: 4, 128>}, {transform_indices = @transform_5, window_bounds = array<i64: 4, 4, 128>}, {transform_indices = @transform_6, window_bounds = array<i64: 4, 4, 128>}]} {
    %c0 = arith.constant 0 : index
    %c0_0 = arith.constant 0 : index
    %0 = vector.load %arg4[%c0, %c0_0] : memref<6x128xf32, #tpu.memory_space<vmem>>, vector<6x128xf32>
    %c0_1 = arith.constant 0 : index
    %c0_2 = arith.constant 0 : index
    %1 = vector.load %arg5[%c0_1, %c0_2] : memref<1x128xf32, #tpu.memory_space<vmem>>, vector<1x128xf32>
    %c0_3 = arith.constant 0 : index
    %c0_4 = arith.constant 0 : index
    %2 = vector.load %arg2[%c0_3, %c0_4] : memref<4x6xf32, #tpu.memory_space<vmem>>, vector<4x6xf32>
    %cst = arith.constant dense<0.000000e+00> : vector<4x128xf32>
    %3 = tpu.matmul %2, %0, %cst {dimension_numbers = #tpu.dot_dimension_numbers<[1], [0], [0], [1], [0, 0, 1, 1], [], []>} : vector<4x6xf32>, vector<6x128xf32>, vector<4x128xf32> -> vector<4x128xf32>
    %4 = vector.broadcast %1 : vector<1x128xf32> to vector<4x128xf32>
    %5 = arith.addf %3, %4 : vector<4x128xf32>
    %c0_5 = arith.constant 0 : index
    %c0_6 = arith.constant 0 : index
    %6 = vector.load %arg3[%c0_5, %c0_6] : memref<4x6xf32, #tpu.memory_space<vmem>>, vector<4x6xf32>
    %cst_7 = arith.constant dense<0.000000e+00> : vector<4x128xf32>
    %7 = tpu.matmul %6, %0, %cst_7 {dimension_numbers = #tpu.dot_dimension_numbers<[1], [0], [0], [1], [0, 0, 1, 1], [], []>} : vector<4x6xf32>, vector<6x128xf32>, vector<4x128xf32> -> vector<4x128xf32>
    %8 = vector.broadcast %1 : vector<1x128xf32> to vector<4x128xf32>
    %9 = arith.addf %7, %8 : vector<4x128xf32>
    %c0_8 = arith.constant 0 : index
    %c0_9 = arith.constant 0 : index
    %10 = vector.load %arg6[%c0_8, %c0_9] : memref<4x128xf32, #tpu.memory_space<vmem>>, vector<1x128xf32>
    %11 = vector.broadcast %10 : vector<1x128xf32> to vector<4x128xf32>
    %12 = arith.mulf %11, %5 : vector<4x128xf32>
    %c0_10 = arith.constant 0 : index
    %c0_11 = arith.constant 0 : index
    %c0_12 = arith.constant 0 : index
    %13 = vector.load %arg7[%c0_10, %c0_11, %c0_12] : memref<4x4x128xf32, #tpu.memory_space<vmem>>, vector<1x4x128xf32>
    %14 = vector.shape_cast %13 : vector<1x4x128xf32> to vector<4x128xf32>
    %15 = vector.shape_cast %12 : vector<4x128xf32> to vector<1x4x128xf32>
    tpu.vector_store %arg7[%c0_10, %c0_11, %c0_12], %15 {strides = array<i32>} : memref<4x4x128xf32, #tpu.memory_space<vmem>>, vector<1x4x128xf32>,
    %16 = vector.broadcast %10 : vector<1x128xf32> to vector<4x128xf32>
    %17 = arith.mulf %16, %9 : vector<4x128xf32>
    %c0_13 = arith.constant 0 : index
    %c0_14 = arith.constant 0 : index
    %c0_15 = arith.constant 0 : index
    %18 = vector.load %arg8[%c0_13, %c0_14, %c0_15] : memref<4x4x128xf32, #tpu.memory_space<vmem>>, vector<1x4x128xf32>
    %19 = vector.shape_cast %18 : vector<1x4x128xf32> to vector<4x128xf32>
    %20 = vector.shape_cast %17 : vector<4x128xf32> to vector<1x4x128xf32>
    tpu.vector_store %arg8[%c0_13, %c0_14, %c0_15], %20 {strides = array<i32>} : memref<4x4x128xf32, #tpu.memory_space<vmem>>, vector<1x4x128xf32>,
    %c1 = arith.constant 1 : index
    %c0_16 = arith.constant 0 : index
    %21 = vector.load %arg6[%c1, %c0_16] : memref<4x128xf32, #tpu.memory_space<vmem>>, vector<1x128xf32>
    %22 = vector.broadcast %21 : vector<1x128xf32> to vector<4x128xf32>
    %23 = arith.mulf %22, %5 : vector<4x128xf32>
    %c1_17 = arith.constant 1 : index
    %c0_18 = arith.constant 0 : index
    %c0_19 = arith.constant 0 : index
    %24 = vector.load %arg7[%c1_17, %c0_18, %c0_19] : memref<4x4x128xf32, #tpu.memory_space<vmem>>, vector<1x4x128xf32>
    %25 = vector.shape_cast %24 : vector<1x4x128xf32> to vector<4x128xf32>
    %26 = vector.shape_cast %23 : vector<4x128xf32> to vector<1x4x128xf32>
    tpu.vector_store %arg7[%c1_17, %c0_18, %c0_19], %26 {strides = array<i32>} : memref<4x4x128xf32, #tpu.memory_space<vmem>>, vector<1x4x128xf32>,
    %27 = vector.broadcast %21 : vector<1x128xf32> to vector<4x128xf32>
    %28 = arith.mulf %27, %9 : vector<4x128xf32>
    %c1_20 = arith.constant 1 : index
    %c0_21 = arith.constant 0 : index
    %c0_22 = arith.constant 0 : index
    %29 = vector.load %arg8[%c1_20, %c0_21, %c0_22] : memref<4x4x128xf32, #tpu.memory_space<vmem>>, vector<1x4x128xf32>
    %30 = vector.shape_cast %29 : vector<1x4x128xf32> to vector<4x128xf32>
    %31 = vector.shape_cast %28 : vector<4x128xf32> to vector<1x4x128xf32>
    tpu.vector_store %arg8[%c1_20, %c0_21, %c0_22], %31 {strides = array<i32>} : memref<4x4x128xf32, #tpu.memory_space<vmem>>, vector<1x4x128xf32>,
    %c2 = arith.constant 2 : index
    %c0_23 = arith.constant 0 : index
    %32 = vector.load %arg6[%c2, %c0_23] : memref<4x128xf32, #tpu.memory_space<vmem>>, vector<1x128xf32>
    %33 = vector.broadcast %32 : vector<1x128xf32> to vector<4x128xf32>
    %34 = arith.mulf %33, %5 : vector<4x128xf32>
    %c2_24 = arith.constant 2 : index
    %c0_25 = arith.constant 0 : index
    %c0_26 = arith.constant 0 : index
    %35 = vector.load %arg7[%c2_24, %c0_25, %c0_26] : memref<4x4x128xf32, #tpu.memory_space<vmem>>, vector<1x4x128xf32>
    %36 = vector.shape_cast %35 : vector<1x4x128xf32> to vector<4x128xf32>
    %37 = vector.shape_cast %34 : vector<4x128xf32> to vector<1x4x128xf32>
    tpu.vector_store %arg7[%c2_24, %c0_25, %c0_26], %37 {strides = array<i32>} : memref<4x4x128xf32, #tpu.memory_space<vmem>>, vector<1x4x128xf32>,
    %38 = vector.broadcast %32 : vector<1x128xf32> to vector<4x128xf32>
    %39 = arith.mulf %38, %9 : vector<4x128xf32>
    %c2_27 = arith.constant 2 : index
    %c0_28 = arith.constant 0 : index
    %c0_29 = arith.constant 0 : index
    %40 = vector.load %arg8[%c2_27, %c0_28, %c0_29] : memref<4x4x128xf32, #tpu.memory_space<vmem>>, vector<1x4x128xf32>
    %41 = vector.shape_cast %40 : vector<1x4x128xf32> to vector<4x128xf32>
    %42 = vector.shape_cast %39 : vector<4x128xf32> to vector<1x4x128xf32>
    tpu.vector_store %arg8[%c2_27, %c0_28, %c0_29], %42 {strides = array<i32>} : memref<4x4x128xf32, #tpu.memory_space<vmem>>, vector<1x4x128xf32>,
    %c3 = arith.constant 3 : index
    %c0_30 = arith.constant 0 : index
    %43 = vector.load %arg6[%c3, %c0_30] : memref<4x128xf32, #tpu.memory_space<vmem>>, vector<1x128xf32>
    %44 = vector.broadcast %43 : vector<1x128xf32> to vector<4x128xf32>
    %45 = arith.mulf %44, %5 : vector<4x128xf32>
    %c3_31 = arith.constant 3 : index
    %c0_32 = arith.constant 0 : index
    %c0_33 = arith.constant 0 : index
    %46 = vector.load %arg7[%c3_31, %c0_32, %c0_33] : memref<4x4x128xf32, #tpu.memory_space<vmem>>, vector<1x4x128xf32>
    %47 = vector.shape_cast %46 : vector<1x4x128xf32> to vector<4x128xf32>
    %48 = vector.shape_cast %45 : vector<4x128xf32> to vector<1x4x128xf32>
    tpu.vector_store %arg7[%c3_31, %c0_32, %c0_33], %48 {strides = array<i32>} : memref<4x4x128xf32, #tpu.memory_space<vmem>>, vector<1x4x128xf32>,
    %49 = vector.broadcast %43 : vector<1x128xf32> to vector<4x128xf32>
    %50 = arith.mulf %49, %9 : vector<4x128xf32>
    %c3_34 = arith.constant 3 : index
    %c0_35 = arith.constant 0 : index
    %c0_36 = arith.constant 0 : index
    %51 = vector.load %arg8[%c3_34, %c0_35, %c0_36] : memref<4x4x128xf32, #tpu.memory_space<vmem>>, vector<1x4x128xf32>
    %52 = vector.shape_cast %51 : vector<1x4x128xf32> to vector<4x128xf32>
    %53 = vector.shape_cast %50 : vector<4x128xf32> to vector<1x4x128xf32>
    tpu.vector_store %arg8[%c3_34, %c0_35, %c0_36], %53 {strides = array<i32>} : memref<4x4x128xf32, #tpu.memory_space<vmem>>, vector<1x4x128xf32>,
    return
  }
  func.func @transform_0(%arg0: i32, %arg1: i32) -> (i32, i32) {
    %c0_i32 = arith.constant 0 : i32
    %c0_i32_0 = arith.constant 0 : i32
    return %arg0, %c0_i32 : i32, i32
  }
  func.func @transform_1(%arg0: i32, %arg1: i32) -> (i32, i32) {
    %c0_i32 = arith.constant 0 : i32
    %c0_i32_0 = arith.constant 0 : i32
    return %arg0, %c0_i32 : i32, i32
  }
  func.func @transform_2(%arg0: i32, %arg1: i32) -> (i32, i32) {
    %c0_i32 = arith.constant 0 : i32
    %c0_i32_0 = arith.constant 0 : i32
    return %c0_i32, %arg1 : i32, i32
  }
  func.func @transform_3(%arg0: i32, %arg1: i32) -> (i32, i32) {
    %c0_i32 = arith.constant 0 : i32
    %c0_i32_0 = arith.constant 0 : i32
    return %c0_i32, %arg1 : i32, i32
  }
  func.func @transform_4(%arg0: i32, %arg1: i32) -> (i32, i32) {
    %c0_i32 = arith.constant 0 : i32
    %c0_i32_0 = arith.constant 0 : i32
    return %c0_i32, %arg1 : i32, i32
  }
  func.func @transform_5(%arg0: i32, %arg1: i32) -> (i32, i32, i32) {
    %c0_i32 = arith.constant 0 : i32
    %c0_i32_0 = arith.constant 0 : i32
    return %c0_i32, %arg0, %arg1 : i32, i32, i32
  }
  func.func @transform_6(%arg0: i32, %arg1: i32) -> (i32, i32, i32) {
    %c0_i32 = arith.constant 0 : i32
    %c0_i32_0 = arith.constant 0 : i32
    return %c0_i32, %arg0, %arg1 : i32, i32, i32
  }
}

</mosaic_0001>

<llo_original>
// kernel: tpu_custom_call.1
$region0: #{tpu_custom_call.1}
  #allocation0 [shape = 'u32[]', space=smem, size = 0x4, offset = 0x4, fixed_abs, tag = 'smem constant byte address 0x4 - core index']
  #allocation1 [shape = 'u32[144,128]{1,0:T(1,128)}', space=vmem, size = 0x12000, scoped, tag = 'internal scratch']
  %s0 = inlined_call_operand.hbm [shape: f32[4,6], index: 0, kind: input, shape index: {}]
  %s1 = inlined_call_operand.hbm [shape: f32[4,6], index: 1, kind: input, shape index: {}]
  %s2 = inlined_call_operand.hbm [shape: f32[6,128], index: 2, kind: input, shape index: {}]
  %s3 = inlined_call_operand.vmem [shape: f32[1,128], index: 3, kind: input, shape index: {}]
  %s4 = inlined_call_operand.vmem [shape: f32[4,128], index: 4, kind: input, shape index: {}]
  %s5 = inlined_call_operand.hbm [shape: f32[4,4,128], index: 5, kind: output, shape index: {0}]
  %s6 = inlined_call_operand.hbm [shape: f32[4,4,128], index: 6, kind: output, shape index: {1}]
  %7 = xla_tuple %s5, %s6
  %s8 = sld [smem:[#allocation0]]
  $region50: #{tpu_custom_call.1} parent=0
    _
  %s10 = ssub.s32 1, %s8
  %s11 = scalar_select 0, %s10, %s8
  $region1: #{tpu_custom_call.1} parent=0
    #allocation2 [shape = 'u8[2048]{0}', space=vmem, size = 0x800, scoped, tag = 'input window, operand 0, single buffered']
    #allocation3 [shape = 's32[1]{0}', space=sflag, size = 0x4, scoped, tag = 'scoped memory for tpu_custom_call.1']
    #allocation4 [shape = 's32[1]{0}', space=sflag, size = 0x4, scoped, tag = 'scoped memory for tpu_custom_call.1']
    #allocation5 [shape = 'u8[2048]{0}', space=vmem, size = 0x800, scoped, tag = 'input window, operand 1, single buffered']
    #allocation6 [shape = 's32[1]{0}', space=sflag, size = 0x4, scoped, tag = 'scoped memory for tpu_custom_call.1']
    #allocation7 [shape = 'u8[4096]{0}', space=vmem, size = 0x1000, scoped, tag = 'input window, operand 2, single buffered']
    #allocation8 [shape = 'u8[8192]{0}', space=vmem, size = 0x2000, scoped, tag = 'output window, operand 0, single buffered']
    #allocation9 [shape = 'u8[8192]{0}', space=vmem, size = 0x2000, scoped, tag = 'output window, operand 1, single buffered']
    #allocation10 [shape = 's32[1]{0}', space=sflag, size = 0x4, scoped, tag = 'scoped memory for tpu_custom_call.1']
    %12 = vsyncpa [#allocation3], 0
    %13 = vsyncpa [#allocation6], 0
    %14 = vsyncpa [#allocation4], 0
    %15 = vsyncpa [#allocation10], 0
    // Predicated region
    $region2: #{tpu_custom_call.1} parent=1 // pred_check
      _
    $region3: #{tpu_custom_call.1} parent=1 // pred_check_branch
      %17 = sbr.rel (0) target = $region5
    $region4: #{tpu_custom_call.1} parent=1 // pred_region
      %s19 = ssub.s32 64, 64
      %20 = vsyncadd [#allocation3], %s19
      %s22 = sshll.u32 [#allocation2], 4
      %s23 = int_to_ptr.vmem [resolvable:$true] %s22
      %25 = dma.hbm_to_vmem [thread:$0]  %s0, 64, %s23, [#allocation3]
    $region5: #{tpu_custom_call.1} parent=1 // pred_fallthru
      _
    // Predicated region
    $region6: #{tpu_custom_call.1} parent=1 // pred_check
      _
    $region7: #{tpu_custom_call.1} parent=1 // pred_check_branch
      %27 = sbr.rel (0) target = $region9
    $region8: #{tpu_custom_call.1} parent=1 // pred_region
      %s29 = ssub.s32 64, 64
      %30 = vsyncadd [#allocation6], %s29
      %s32 = sshll.u32 [#allocation5], 4
      %s33 = int_to_ptr.vmem [resolvable:$true] %s32
      %35 = dma.hbm_to_vmem [thread:$0]  %s1, 64, %s33, [#allocation6]
    $region9: #{tpu_custom_call.1} parent=1 // pred_fallthru
      _
    // Predicated region
    $region10: #{tpu_custom_call.1} parent=1 // pred_check
      _
    $region11: #{tpu_custom_call.1} parent=1 // pred_check_branch
      %37 = sbr.rel (0) target = $region13
    $region12: #{tpu_custom_call.1} parent=1 // pred_region
      %s39 = ssub.s32 128, 128
      %40 = vsyncadd [#allocation6], %s39
      %s42 = sshll.u32 [#allocation7], 4
      %s43 = int_to_ptr.vmem [resolvable:$true] %s42
      %45 = dma.hbm_to_vmem [thread:$0]  %s2, 128, %s43, [#allocation6]
    $region13: #{tpu_custom_call.1} parent=1 // pred_fallthru
      _
    // Predicated region
    $region14: #{tpu_custom_call.1} parent=1 // pred_check
      _
    $region15: #{tpu_custom_call.1} parent=1 // pred_check_branch
      %47 = sbr.rel (0) target = $region17
    $region16: #{tpu_custom_call.1} parent=1 // pred_region
      _
    $region17: #{tpu_custom_call.1} parent=1 // pred_fallthru
      _
    // Predicated region
    $region18: #{tpu_custom_call.1} parent=1 // pred_check
      _
    $region19: #{tpu_custom_call.1} parent=1 // pred_check_branch
      %49 = sbr.rel (0) target = $region21
    $region20: #{tpu_custom_call.1} parent=1 // pred_region
      _
    $region21: #{tpu_custom_call.1} parent=1 // pred_fallthru
      _
    // Predicated region
    $region22: #{tpu_custom_call.1} parent=1 // pred_check
      _
    $region23: #{tpu_custom_call.1} parent=1 // pred_check_branch
      %51 = sbr.rel (0) target = $region25
    $region24: #{tpu_custom_call.1} parent=1 // pred_region
      %52 = dma.done [#allocation3], 64
    $region25: #{tpu_custom_call.1} parent=1 // pred_fallthru
      _
    // Predicated region
    $region26: #{tpu_custom_call.1} parent=1 // pred_check
      _
    $region27: #{tpu_custom_call.1} parent=1 // pred_check_branch
      %54 = sbr.rel (0) target = $region29
    $region28: #{tpu_custom_call.1} parent=1 // pred_region
      %55 = dma.done [#allocation6], 64
    $region29: #{tpu_custom_call.1} parent=1 // pred_fallthru
      _
    // Predicated region
    $region30: #{tpu_custom_call.1} parent=1 // pred_check
      _
    $region31: #{tpu_custom_call.1} parent=1 // pred_check_branch
      %57 = sbr.rel (0) target = $region33
    $region32: #{tpu_custom_call.1} parent=1 // pred_region
      %58 = dma.done [#allocation6], 128
    $region33: #{tpu_custom_call.1} parent=1 // pred_fallthru
      _
    %v59 = vld [vmem:[#allocation7] sm:$0x3f]
    %v60 = vld [vmem:[%s3] sm:$0x1]
    %v61 = vld [vmem:[#allocation2] sm:$0xf]
    %v63 = vlaneseq
    %v64 = vshrl.u32 %v63, 7
    %v65 = vsub.s32 0, %v64
    %v66 = vrot.slane %v60, %v65
    %vm68 = vcmask 48128
    %v70 = vsel %vm68, %v61, 0
    %vm72 = vcmask 1045504
    %v74 = vsel %vm72, %v59, 0
    %76 = vmatprep.subr.mxu0 0.0
    %77 = vmatpush1.msra.mxu0 %v74
    %78 = vmatprep.subr.mxu0 0.0
    %79 = vmatpush1.msra.mxu0 0.0
    %80 = vmatprep.subr.mxu0 0.0
    %81 = vmatpush1.msra.mxu0 0.0
    %82 = vmatprep.subr.mxu0 0.0
    %83 = vmatpush1.msra.mxu0 0.0
    %84 = vmatprep.subr.mxu0 0.0
    %85 = vmatpush1.msra.mxu0 0.0
    %86 = vmatprep.subr.mxu0 0.0
    %87 = vmatpush1.msra.mxu0 0.0
    %88 = vmatprep.subr.mxu0 0.0
    %89 = vmatpush1.msra.mxu0 0.0
    %90 = vmatprep.subr.mxu0 0.0
    %91 = vmatpush1.msra.mxu0 0.0
    %92 = vmatprep.subr.mxu0 0.0
    %93 = vmatpush1.msra.mxu0 0.0
    %94 = vmatprep.subr.mxu0 0.0
    %95 = vmatpush1.msra.mxu0 0.0
    %96 = vmatprep.subr.mxu0 0.0
    %97 = vmatpush1.msra.mxu0 0.0
    %98 = vmatprep.subr.mxu0 0.0
    %99 = vmatpush1.msra.mxu0 0.0
    %100 = vmatprep.subr.mxu0 0.0
    %101 = vmatpush1.msra.mxu0 0.0
    %102 = vmatprep.subr.mxu0 0.0
    %103 = vmatpush1.msra.mxu0 0.0
    %104 = vmatprep.subr.mxu0 0.0
    %105 = vmatpush1.msra.mxu0 0.0
    %106 = vmatprep.subr.mxu0 0.0
    %107 = vmatpush1.msra.mxu0 0.0
    %108 = vmatprep.subr.mxu0 0.0
    %109 = vmatpush1.msra.mxu0 0.0
    %110 = vmatprep.subr.mxu0 0.0
    %111 = vmatpush1.msra.mxu0 0.0
    %112 = vmatprep.subr.mxu0 0.0
    %113 = vmatpush1.msra.mxu0 0.0
    %114 = vmatprep.subr.mxu0 0.0
    %115 = vmatpush1.msra.mxu0 0.0
    %116 = vmatprep.subr.mxu0 0.0
    %117 = vmatpush1.msra.mxu0 0.0
    %118 = vmatprep.subr.mxu0 0.0
    %119 = vmatpush1.msra.mxu0 0.0
    %120 = vmatprep.subr.mxu0 0.0
    %121 = vmatpush1.msra.mxu0 0.0
    %122 = vmatprep.subr.mxu0 0.0
    %123 = vmatpush1.msra.mxu0 0.0
    %124 = vmatprep.subr.mxu0 0.0
    %125 = vmatpush1.msra.mxu0 0.0
    %126 = vmatprep.subr.mxu0 0.0
    %127 = vmatpush1.msra.mxu0 0.0
    %128 = vmatprep.subr.mxu0 0.0
    %129 = vmatpush1.msra.mxu0 0.0
    %130 = vmatprep.subr.mxu0 0.0
    %131 = vmatpush1.msra.mxu0 0.0
    %132 = vmatprep.subr.mxu0 0.0
    %133 = vmatpush1.msra.mxu0 0.0
    %134 = vmatprep.subr.mxu0 0.0
    %135 = vmatpush1.msra.mxu0 0.0
    %136 = vmatprep.subr.mxu0 0.0
    %137 = vmatpush1.msra.mxu0 0.0
    %138 = vmatprep.subr.mxu0 0.0
    %139 = vmatpush1.msra.mxu0 0.0
    %140 = vmatprep.mubr.f32.mxu0 0.0
    %141 = vmatmul.mubr.f32.gmra.mrb[0].mxu0 %v70
    %v142 = vpop.f32.mrb[0].mxu0
    %v143 = vadd.f32 %v66, %v142
    %v144 = vpop.f32.mrb[0].mxu0
    %145 = vdwg.mxu0
    %v146 = vld [vmem:[#allocation5] sm:$0xf]
    %v148 = vsel %vm68, %v146, 0
    %150 = vmatprep.subr.mxu0 0.0
    %151 = vmatpush1.msra.mxu0 %v74
    %152 = vmatprep.subr.mxu0 0.0
    %153 = vmatpush1.msra.mxu0 0.0
    %154 = vmatprep.subr.mxu0 0.0
    %155 = vmatpush1.msra.mxu0 0.0
    %156 = vmatprep.subr.mxu0 0.0
    %157 = vmatpush1.msra.mxu0 0.0
    %158 = vmatprep.subr.mxu0 0.0
    %159 = vmatpush1.msra.mxu0 0.0
    %160 = vmatprep.subr.mxu0 0.0
    %161 = vmatpush1.msra.mxu0 0.0
    %162 = vmatprep.subr.mxu0 0.0
    %163 = vmatpush1.msra.mxu0 0.0
    %164 = vmatprep.subr.mxu0 0.0
    %165 = vmatpush1.msra.mxu0 0.0
    %166 = vmatprep.subr.mxu0 0.0
    %167 = vmatpush1.msra.mxu0 0.0
    %168 = vmatprep.subr.mxu0 0.0
    %169 = vmatpush1.msra.mxu0 0.0
    %170 = vmatprep.subr.mxu0 0.0
    %171 = vmatpush1.msra.mxu0 0.0
    %172 = vmatprep.subr.mxu0 0.0
    %173 = vmatpush1.msra.mxu0 0.0
    %174 = vmatprep.subr.mxu0 0.0
    %175 = vmatpush1.msra.mxu0 0.0
    %176 = vmatprep.subr.mxu0 0.0
    %177 = vmatpush1.msra.mxu0 0.0
    %178 = vmatprep.subr.mxu0 0.0
    %179 = vmatpush1.msra.mxu0 0.0
    %180 = vmatprep.subr.mxu0 0.0
    %181 = vmatpush1.msra.mxu0 0.0
    %182 = vmatprep.subr.mxu0 0.0
    %183 = vmatpush1.msra.mxu0 0.0
    %184 = vmatprep.subr.mxu0 0.0
    %185 = vmatpush1.msra.mxu0 0.0
    %186 = vmatprep.subr.mxu0 0.0
    %187 = vmatpush1.msra.mxu0 0.0
    %188 = vmatprep.subr.mxu0 0.0
    %189 = vmatpush1.msra.mxu0 0.0
    %190 = vmatprep.subr.mxu0 0.0
    %191 = vmatpush1.msra.mxu0 0.0
    %192 = vmatprep.subr.mxu0 0.0
    %193 = vmatpush1.msra.mxu0 0.0
    %194 = vmatprep.subr.mxu0 0.0
    %195 = vmatpush1.msra.mxu0 0.0
    %196 = vmatprep.subr.mxu0 0.0
    %197 = vmatpush1.msra.mxu0 0.0
    %198 = vmatprep.subr.mxu0 0.0
    %199 = vmatpush1.msra.mxu0 0.0
    %200 = vmatprep.subr.mxu0 0.0
    %201 = vmatpush1.msra.mxu0 0.0
    %202 = vmatprep.subr.mxu0 0.0
    %203 = vmatpush1.msra.mxu0 0.0
    %204 = vmatprep.subr.mxu0 0.0
    %205 = vmatpush1.msra.mxu0 0.0
    %206 = vmatprep.subr.mxu0 0.0
    %207 = vmatpush1.msra.mxu0 0.0
    %208 = vmatprep.subr.mxu0 0.0
    %209 = vmatpush1.msra.mxu0 0.0
    %210 = vmatprep.subr.mxu0 0.0
    %211 = vmatpush1.msra.mxu0 0.0
    %212 = vmatprep.subr.mxu0 0.0
    %213 = vmatpush1.msra.mxu0 0.0
    %214 = vmatprep.mubr.f32.mxu0 0.0
    %215 = vmatmul.mubr.f32.gmra.mrb[0].mxu0 %v148
    %v216 = vpop.f32.mrb[0].mxu0
    %v217 = vadd.f32 %v66, %v216
    %v218 = vpop.f32.mrb[0].mxu0
    %219 = vdwg.mxu0
    %v220 = vld [vmem:[%s4] sm:$0x1]
    %v221 = vlaneseq
    %v222 = vshrl.u32 %v221, 7
    %v223 = vsub.s32 0, %v222
    %v224 = vrot.slane %v220, %v223
    %v225 = vmul.f32 %v224, %v143
    %226 = vst [vmem:[#allocation8] sm:$0xf] %v225
    %v227 = vmul.f32 %v224, %v217
    %228 = vst [vmem:[#allocation9] sm:$0xf] %v227
    %v229 = vld [vmem:[%s4 + $0x1] sm:$0x1]
    %v230 = vlaneseq
    %v231 = vshrl.u32 %v230, 7
    %v232 = vsub.s32 0, %v231
    %v233 = vrot.slane %v229, %v232
    %v234 = vmul.f32 %v233, %v143
    %s235 = scalar_lea.vmem [#allocation8], 4
    %236 = vst [vmem:[%s235] sm:$0xf] %v234
    %v237 = vmul.f32 %v233, %v217
    %s238 = scalar_lea.vmem [#allocation9], 4
    %239 = vst [vmem:[%s238] sm:$0xf] %v237
    %v240 = vld [vmem:[%s4 + $0x2] sm:$0x1]
    %v241 = vlaneseq
    %v242 = vshrl.u32 %v241, 7
    %v243 = vsub.s32 0, %v242
    %v244 = vrot.slane %v240, %v243
    %v245 = vmul.f32 %v244, %v143
    %s246 = scalar_lea.vmem [#allocation8], 8
    %247 = vst [vmem:[%s246] sm:$0xf] %v245
    %v248 = vmul.f32 %v244, %v217
    %s249 = scalar_lea.vmem [#allocation9], 8
    %250 = vst [vmem:[%s249] sm:$0xf] %v248
    %v251 = vld [vmem:[%s4 + $0x3] sm:$0x1]
    %v252 = vlaneseq
    %v253 = vshrl.u32 %v252, 7
    %v254 = vsub.s32 0, %v253
    %v255 = vrot.slane %v251, %v254
    %v256 = vmul.f32 %v255, %v143
    %s257 = scalar_lea.vmem [#allocation8], 12
    %258 = vst [vmem:[%s257] sm:$0xf] %v256
    %v259 = vmul.f32 %v255, %v217
    %s260 = scalar_lea.vmem [#allocation9], 12
    %261 = vst [vmem:[%s260] sm:$0xf] %v259
    // Predicated region
    $region34: #{tpu_custom_call.1} parent=1 // pred_check
      _
    $region35: #{tpu_custom_call.1} parent=1 // pred_check_branch
      %263 = sbr.rel (0) target = $region37
    $region36: #{tpu_custom_call.1} parent=1 // pred_region
      %s265 = ssub.s32 256, 256
      %266 = vsyncadd [#allocation4], %s265
      %s267 = sshll.u32 [#allocation8], 4
      %s268 = int_to_ptr.vmem [resolvable:$true] %s267
      %273 = dma.vmem_to_hbm [thread:$0]  %s268, 256, %s5, [#allocation4], 64, 64, 4
    $region37: #{tpu_custom_call.1} parent=1 // pred_fallthru
      _
    // Predicated region
    $region38: #{tpu_custom_call.1} parent=1 // pred_check
      _
    $region39: #{tpu_custom_call.1} parent=1 // pred_check_branch
      %275 = sbr.rel (0) target = $region41
    $region40: #{tpu_custom_call.1} parent=1 // pred_region
      %s277 = ssub.s32 256, 256
      %278 = vsyncadd [#allocation10], %s277
      %s279 = sshll.u32 [#allocation9], 4
      %s280 = int_to_ptr.vmem [resolvable:$true] %s279
      %285 = dma.vmem_to_hbm [thread:$0]  %s280, 256, %s6, [#allocation10], 64, 64, 4
    $region41: #{tpu_custom_call.1} parent=1 // pred_fallthru
      _
    // Predicated region
    $region42: #{tpu_custom_call.1} parent=1 // pred_check
      _
    $region43: #{tpu_custom_call.1} parent=1 // pred_check_branch
      %287 = sbr.rel (0) target = $region45
    $region44: #{tpu_custom_call.1} parent=1 // pred_region
      %288 = dma.done [#allocation4], 256
    $region45: #{tpu_custom_call.1} parent=1 // pred_fallthru
      _
    // Predicated region
    $region46: #{tpu_custom_call.1} parent=1 // pred_check
      _
    $region47: #{tpu_custom_call.1} parent=1 // pred_check_branch
      %290 = sbr.rel (0) target = $region49
    $region48: #{tpu_custom_call.1} parent=1 // pred_region
      %291 = dma.done [#allocation10], 256
    $region49: #{tpu_custom_call.1} parent=1 // pred_fallthru
      _
    %292 = vsyncpa [#allocation3], 1
    %293 = vsyncpa [#allocation6], 1
    %294 = vsyncpa [#allocation4], 1
    %295 = vsyncpa [#allocation10], 1

</llo_original>
